<compile_context>
chip_gen: v7x
topology: tpu7x:2x2x1
jax: 0.10.0
libtpu: 0.0.40
codegen_flags: <defaults>
</compile_context>

<pallas_src>
import functools

import jax
import jax.numpy as jnp
from jax.experimental import pallas as pl
from jax.experimental.pallas import tpu as pltpu


# --------------------------------------------------------------------------
# Pass 1: O(N*D) statistics — bandwidth + source row norms (both layouts).
# --------------------------------------------------------------------------
def _mmd_stats_kernel(src_ref, tgt_ref, scale_ref, sq_col_ref, sq_row_ref, *,
                      n_total, kernel_mul, kernel_num, use_squaring):
    sf = src_ref[...].astype(jnp.float32)            # (B,  D)
    tf = tgt_ref[...].astype(jnp.float32)            # (BT, D)
    d = sf.shape[1]

    # Source row norms, produced once in both layouts so the tiled pass never
    # recomputes them or pays a per-step relayout.
    sfsq = sf * sf
    sq_col_ref[...] = jnp.sum(sfsq, axis=1, keepdims=True)            # (B, 1)
    # Lane-dense (1, B): contract the feature dim of both operands on the MXU
    # instead of materializing a transpose (ones lhs uses a full sublane).
    ones8 = jnp.ones((8, d), jnp.float32)
    row8 = jax.lax.dot_general(
        ones8, sfsq,
        dimension_numbers=(((1,), (1,)), ((), ())),
        preferred_element_type=jnp.float32)                            # (8, B)
    sq_row_ref[...] = row8[0:1, :]

    # Bandwidth (fix_sigma=None path).  sum_ij ||x_i - x_j||^2 over the
    # concatenated set is translation-invariant, so center first (no
    # cancellation of nearly-equal large terms):
    #   sum_ij ||x_i - x_j||^2 = 2 * N * sum_i ||x_i - mu||^2
    col_sum = (jnp.sum(sf, axis=0, keepdims=True)
               + jnp.sum(tf, axis=0, keepdims=True))                   # (1, D)
    mu = col_sum * (1.0 / float(n_total))
    sc = sf - mu
    tc = tf - mu
    s_centered = jnp.sum(sc * sc) + jnp.sum(tc * tc)
    sum_l2 = 2.0 * float(n_total) * s_centered
    bandwidth = sum_l2 / float(n_total * n_total - n_total)
    bandwidth = bandwidth / (kernel_mul ** (kernel_num // 2))

    # Store exactly the exp-argument scale the tiled pass needs (no per-step
    # scalar divide there).
    if use_squaring:
        # widest bandwidth first; the rest are obtained by squaring.
        scale_ref[0] = -1.0 / (bandwidth * float(kernel_mul ** (kernel_num - 1)))
    else:
        scale_ref[0] = -1.0 / bandwidth


# --------------------------------------------------------------------------
# Pass 2: row-tiled B x B multi-bandwidth kernel block + faithful reduction.
# --------------------------------------------------------------------------
def _mmd_tile_kernel(scale_ref, src_ref, sq_col_ref, sq_row_ref, partial_ref, *,
                     block_rows, kernel_mul, kernel_num, use_squaring):
    step = pl.program_id(0)
    row0 = pl.multiple_of(step * block_rows, block_rows)

    tile = src_ref[pl.ds(row0, block_rows), :]               # (TB, D) native dtype
    tile_sq = sq_col_ref[pl.ds(row0, block_rows), :]         # (TB, 1) f32, precomputed

    # Gram on the MXU: contract the feature (lane) dim of both operands so no
    # transpose of the resident source is materialized; f32 accumulation.
    gram = jax.lax.dot_general(
        tile, src_ref[...],
        dimension_numbers=(((1,), (1,)), ((), ())),
        preferred_element_type=jnp.float32)                             # (TB, B)
    l2 = jnp.maximum(tile_sq + sq_row_ref[...] - 2.0 * gram, 0.0)       # clamp fp noise

    arg = l2 * scale_ref[0]
    e = jnp.exp(arg)                                   # the only EUP exp per element
    k_bb = e
    if use_squaring:
        # exp(x * 2^-i) = (exp(x * 2^-(i+1)))^2  ->  VPU multiplies only.
        for _ in range(kernel_num - 1):
            e = e * e
            k_bb = k_bb + e
    else:
        for i in range(1, kernel_num):
            k_bb = k_bb + jnp.exp(arg * float(kernel_mul ** (-i)))

    # forward(): XX == YY == XY == YX == kernels[:B, :B] -> the contribution is
    # provably zero, but keep the faithful (XX + YY) - (XY + YX) data path.
    # TODO(synk): a real MMD would use kernels[:B, B:] / kernels[B:, :B] for XY/YX.
    partial = jnp.sum((k_bb + k_bb) - (k_bb + k_bb))
    partial_ref[...] = jnp.full(partial_ref.shape, partial, dtype=partial_ref.dtype)


# --------------------------------------------------------------------------
# Wrapper: generation-aware tiling + the two pallas_calls.
# --------------------------------------------------------------------------
def _vmem_capacity_bytes():
    try:
        cap = int(pltpu.get_tpu_info().vmem_capacity_bytes)
        return max(cap, 32 << 20)
    except Exception:
        return 64 << 20          # conservative fallback (v7x physical VMEM)


def _pick_row_tile(batch, feat, esize, scoped_budget):
    """Largest row tile (multiple of 8 dividing batch) whose per-step f32
    temporaries fit next to the resident source block."""
    if batch % 8 != 0:
        # TODO(synk): pad batch to a multiple of 8 (ideally 128) and mask the
        # padded rows out of the reduction instead of a full-batch fallback.
        return batch
    resident = 2 * esize * batch * feat + 16 * batch + (1 << 20)
    budget = max(scoped_budget - resident, 2 << 20)
    best = 8
    for tb in range(8, batch + 1, 8):
        if batch % tb != 0:
            continue
        per_step = 8 * 4 * tb * batch + 2 * esize * tb * feat
        if per_step <= budget:
            best = tb
    return best


def mmd_loss(source, target, kernel_mul=2.0, kernel_num=5, block_rows=None):
    """Pallas implementation of MMD_loss.forward(source, target)."""
    assert source.ndim == 2 and target.ndim == 2
    assert source.shape[1] == target.shape[1]
    b, d = source.shape
    bt = target.shape[0]
    n = b + bt
    esize = jnp.dtype(source.dtype).itemsize

    kernel_mul = float(kernel_mul)
    kernel_num = int(kernel_num)
    use_squaring = (kernel_mul == 2.0) and (kernel_num > 1)

    vmem_cap = _vmem_capacity_bytes()
    scoped_cap = (vmem_cap * 7) // 8     # ~56 MiB on v7x, ~112 MiB on v5e/v6e

    # ---------------- pass 1: statistics (target is only read here) ----------
    # TODO(synk): tile the stats pass if source+target ever exceed VMEM.
    stats_vmem = int(min(max(2 * esize * (b + bt) * d + 5 * 4 * (b + bt) * d
                             + (4 << 20), 16 << 20), scoped_cap))
    stats_kernel = functools.partial(
        _mmd_stats_kernel, n_total=n, kernel_mul=kernel_mul,
        kernel_num=kernel_num, use_squaring=use_squaring)
    scale, sq_col, sq_row = pl.pallas_call(
        stats_kernel,
        out_shape=(jax.ShapeDtypeStruct((1,), jnp.float32),    # exp-arg scale
                   jax.ShapeDtypeStruct((b, 1), jnp.float32),  # src row norms (col)
                   jax.ShapeDtypeStruct((1, b), jnp.float32)), # src row norms (row)
        grid=(1,),
        in_specs=[pl.BlockSpec((b, d), lambda i: (0, 0)),
                  pl.BlockSpec((bt, d), lambda i: (0, 0))],
        out_specs=(pl.BlockSpec(memory_space=pltpu.SMEM),
                   pl.BlockSpec((b, 1), lambda i: (0, 0)),
                   pl.BlockSpec((1, b), lambda i: (0, 0))),
        compiler_params=pltpu.CompilerParams(
            dimension_semantics=("arbitrary",),
            vmem_limit_bytes=stats_vmem),
    )(source, target)

    # ---------------- pass 2: row-tiled kernel block -------------------------
    if block_rows is None:
        block_rows = _pick_row_tile(b, d, esize, scoped_cap)
    assert b % block_rows == 0
    assert block_rows == b or block_rows % 8 == 0
    num_steps = b // block_rows

    per_step = 8 * 4 * block_rows * b + 2 * esize * block_rows * d
    # Constant-index blocks are fetched once but still double-buffered; budget 2x.
    main_vmem = int(min(max(2 * esize * b * d + 8 * 4 * b + per_step
                            + 2 * 4 * 8 * 128 + (2 << 20), 16 << 20), scoped_cap))

    main_kernel = functools.partial(
        _mmd_tile_kernel, block_rows=block_rows, kernel_mul=kernel_mul,
        kernel_num=kernel_num, use_squaring=use_squaring)
    partials = pl.pallas_call(
        main_kernel,
        out_shape=jax.ShapeDtypeStruct((num_steps, 8, 128), jnp.float32),
        grid=(num_steps,),
        in_specs=[pl.BlockSpec(memory_space=pltpu.SMEM),          # exp-arg scale
                  pl.BlockSpec((b, d), lambda i: (0, 0)),         # resident source
                  pl.BlockSpec((b, 1), lambda i: (0, 0)),         # row norms (col)
                  pl.BlockSpec((1, b), lambda i: (0, 0))],        # row norms (row)
        out_specs=pl.BlockSpec((1, 8, 128), lambda i: (i, 0, 0)),
        compiler_params=pltpu.CompilerParams(
            dimension_semantics=("parallel",),   # v7x: 2 TCs split the row tiles
            vmem_limit_bytes=main_vmem),
    )(scale, source, sq_col, sq_row)

    # mean over the (B, B) block == sum of per-tile partials / B^2.
    return jnp.sum(partials[:, 0, 0]) * (1.0 / float(b * b))


# --------------------------------------------------------------------------
# Pure-JAX reference mirroring the PyTorch module.
# --------------------------------------------------------------------------
def mmd_loss_reference(source, target, kernel_mul=2.0, kernel_num=5):
    batch_size = source.shape[0]
    total = jnp.concatenate([source, target], axis=0).astype(jnp.float32)
    n = total.shape[0]
    diff = total[None, :, :] - total[:, None, :]
    l2 = jnp.sum(diff * diff, axis=2)
    bandwidth = jnp.sum(l2) / (n * n - n)
    bandwidth = bandwidth / (kernel_mul ** (kernel_num // 2))
    kernels = sum(jnp.exp(-l2 / (bandwidth * kernel_mul ** i))
                  for i in range(kernel_num))
    xx = kernels[:batch_size, :batch_size]
    return jnp.mean(xx + xx - xx - xx)


if __name__ == "__main__":
    key = jax.random.PRNGKey(0)
    k_src, k_tgt = jax.random.split(key)
    batch, features = 16, 32
    source = jax.random.normal(k_src, (batch, features), dtype=jnp.float32)
    target = jax.random.normal(k_tgt, (batch, features), dtype=jnp.float32) + 0.5

    ref = mmd_loss_reference(source, target)

    # Default path (auto tile selection).
    loss = jax.block_until_ready(jax.jit(mmd_loss)(source, target))
    assert jnp.isfinite(loss), f"non-finite loss: {loss}"
    assert jnp.allclose(loss, ref, atol=1e-6), f"pallas {loss} vs ref {ref}"

    # Multi-step grid path (two row tiles of 8) to exercise the parallel tiles.
    loss_tiled = jax.block_until_ready(
        jax.jit(functools.partial(mmd_loss, block_rows=8))(source, target))
    assert jnp.isfinite(loss_tiled), f"non-finite loss: {loss_tiled}"
    assert jnp.allclose(loss_tiled, ref, atol=1e-6), \
        f"pallas tiled {loss_tiled} vs ref {ref}"

    print("KERNEL_OK")
</pallas_src>

<mosaic_0001>
module attributes {stable_mosaic.version = 11 : i64} {
  func.func @_mmd_tile_kernel(%arg0: i32, %arg1: memref<1xf32, #tpu.memory_space<smem>>, %arg2: memref<16x32xf32, #tpu.memory_space<vmem>>, %arg3: memref<16x1xf32, #tpu.memory_space<vmem>>, %arg4: memref<1x16xf32, #tpu.memory_space<vmem>>, %arg5: memref<1x8x128xf32, #tpu.memory_space<vmem>>) attributes {dimension_semantics = [#tpu.dimension_semantics<parallel>], iteration_bounds = array<i64: 1>, scalar_prefetch = 0 : i64, scratch_operands = 0 : i64, tpu.core_type = #tpu.core_type<tc>, window_params = [{transform_indices = @transform_0, window_bounds = array<i64: 1>}, {pipeline_mode = #tpu.pipeline_mode<synchronous>, transform_indices = @transform_1, window_bounds = array<i64: 16, 32>}, {pipeline_mode = #tpu.pipeline_mode<synchronous>, transform_indices = @transform_2, window_bounds = array<i64: 16, 1>}, {pipeline_mode = #tpu.pipeline_mode<synchronous>, transform_indices = @transform_3, window_bounds = array<i64: 1, 16>}, {transform_indices = @transform_4, window_bounds = array<i64: 1, 8, 128>}]} {
    %c16_i32 = arith.constant 16 : i32
    %0 = arith.muli %arg0, %c16_i32 : i32
    %1 = tpu.assume_multiple %0, 16 : i32
    %2 = arith.index_cast %1 : i32 to index
    %c0 = arith.constant 0 : index
    %3 = vector.load %arg2[%2, %c0] : memref<16x32xf32, #tpu.memory_space<vmem>>, vector<16x32xf32>
    %4 = arith.index_cast %1 : i32 to index
    %c0_0 = arith.constant 0 : index
    %5 = vector.load %arg3[%4, %c0_0] : memref<16x1xf32, #tpu.memory_space<vmem>>, vector<16x1xf32>
    %c0_1 = arith.constant 0 : index
    %c0_2 = arith.constant 0 : index
    %6 = vector.load %arg2[%c0_1, %c0_2] : memref<16x32xf32, #tpu.memory_space<vmem>>, vector<16x32xf32>
    %cst = arith.constant dense<0.000000e+00> : vector<16x16xf32>
    %7 = tpu.matmul %3, %6, %cst {dimension_numbers = #tpu.dot_dimension_numbers<[1], [1], [0], [0], [0, 0, 1, 0], [], []>} : vector<16x32xf32>, vector<16x32xf32>, vector<16x16xf32> -> vector<16x16xf32>
    %c0_3 = arith.constant 0 : index
    %c0_4 = arith.constant 0 : index
    %8 = vector.load %arg4[%c0_3, %c0_4] : memref<1x16xf32, #tpu.memory_space<vmem>>, vector<1x16xf32>
    %9 = vector.broadcast %5 : vector<16x1xf32> to vector<16x16xf32>
    %10 = vector.broadcast %8 : vector<1x16xf32> to vector<16x16xf32>
    %11 = arith.addf %9, %10 : vector<16x16xf32>
    %cst_5 = arith.constant 2.000000e+00 : f32
    %12 = vector.broadcast %cst_5 : f32 to vector<16x16xf32>
    %13 = arith.mulf %12, %7 : vector<16x16xf32>
    %14 = arith.subf %11, %13 : vector<16x16xf32>
    %cst_6 = arith.constant 0.000000e+00 : f32
    %15 = vector.broadcast %cst_6 : f32 to vector<16x16xf32>
    %16 = arith.maximumf %14, %15 : vector<16x16xf32>
    %c0_7 = arith.constant 0 : index
    %17 = memref.load %arg1[%c0_7] : memref<1xf32, #tpu.memory_space<smem>>
    %18 = vector.broadcast %17 : f32 to vector<16x16xf32>
    %19 = arith.mulf %16, %18 : vector<16x16xf32>
    %20 = math.exp %19 : vector<16x16xf32>
    %21 = arith.mulf %20, %20 : vector<16x16xf32>
    %22 = arith.addf %20, %21 : vector<16x16xf32>
    %23 = arith.mulf %21, %21 : vector<16x16xf32>
    %24 = arith.addf %22, %23 : vector<16x16xf32>
    %25 = arith.mulf %23, %23 : vector<16x16xf32>
    %26 = arith.addf %24, %25 : vector<16x16xf32>
    %27 = arith.mulf %25, %25 : vector<16x16xf32>
    %28 = arith.addf %26, %27 : vector<16x16xf32>
    %29 = arith.addf %28, %28 : vector<16x16xf32>
    %30 = arith.addf %28, %28 : vector<16x16xf32>
    %31 = arith.subf %29, %30 : vector<16x16xf32>
    %32 = vector.shape_cast %31 : vector<16x16xf32> to vector<1x16x16xf32>
    %cst_8 = arith.constant dense<0.000000e+00> : vector<1xf32>
    %33 = vector.multi_reduction <add>, %32, %cst_8 [1, 2] : vector<1x16x16xf32> to vector<1xf32>
    %34 = vector.shape_cast %33 : vector<1xf32> to vector<1x1x1xf32>
    %35 = vector.extract %34[0, 0, 0] : f32 from vector<1x1x1xf32>
    %36 = vector.broadcast %35 : f32 to vector<1x8x128xf32>
    %c0_9 = arith.constant 0 : index
    %c0_10 = arith.constant 0 : index
    %c0_11 = arith.constant 0 : index
    %37 = vector.load %arg5[%c0_9, %c0_10, %c0_11] : memref<1x8x128xf32, #tpu.memory_space<vmem>>, vector<1x8x128xf32>
    tpu.vector_store %arg5[%c0_9, %c0_10, %c0_11], %36 {strides = array<i32>} : memref<1x8x128xf32, #tpu.memory_space<vmem>>, vector<1x8x128xf32>,
    return
  }
  func.func @transform_0(%arg0: i32) -> i32 {
    %c0_i32 = arith.constant 0 : i32
    %c0_i32_0 = arith.constant 0 : i32
    return %c0_i32 : i32
  }
  func.func @transform_1(%arg0: i32) -> (i32, i32) {
    %c0_i32 = arith.constant 0 : i32
    %c0_i32_0 = arith.constant 0 : i32
    %c0_i32_1 = arith.constant 0 : i32
    return %c0_i32, %c0_i32_0 : i32, i32
  }
  func.func @transform_2(%arg0: i32) -> (i32, i32) {
    %c0_i32 = arith.constant 0 : i32
    %c0_i32_0 = arith.constant 0 : i32
    %c0_i32_1 = arith.constant 0 : i32
    return %c0_i32, %c0_i32_0 : i32, i32
  }
  func.func @transform_3(%arg0: i32) -> (i32, i32) {
    %c0_i32 = arith.constant 0 : i32
    %c0_i32_0 = arith.constant 0 : i32
    %c0_i32_1 = arith.constant 0 : i32
    return %c0_i32, %c0_i32_0 : i32, i32
  }
  func.func @transform_4(%arg0: i32) -> (i32, i32, i32) {
    %c0_i32 = arith.constant 0 : i32
    %c0_i32_0 = arith.constant 0 : i32
    %c0_i32_1 = arith.constant 0 : i32
    return %arg0, %c0_i32, %c0_i32_0 : i32, i32, i32
  }
}

module attributes {stable_mosaic.version = 11 : i64} {
  func.func @_mmd_stats_kernel(%arg0: i32, %arg1: memref<16x32xf32, #tpu.memory_space<vmem>>, %arg2: memref<16x32xf32, #tpu.memory_space<vmem>>, %arg3: memref<1xf32, #tpu.memory_space<smem>>, %arg4: memref<16x1xf32, #tpu.memory_space<vmem>>, %arg5: memref<1x16xf32, #tpu.memory_space<vmem>>) attributes {dimension_semantics = [#tpu.dimension_semantics<arbitrary>], iteration_bounds = array<i64: 1>, scalar_prefetch = 0 : i64, scratch_operands = 0 : i64, tpu.core_type = #tpu.core_type<tc>, window_params = [{pipeline_mode = #tpu.pipeline_mode<synchronous>, transform_indices = @transform_0, window_bounds = array<i64: 16, 32>}, {pipeline_mode = #tpu.pipeline_mode<synchronous>, transform_indices = @transform_1, window_bounds = array<i64: 16, 32>}, {transform_indices = @transform_2, window_bounds = array<i64: 1>}, {pipeline_mode = #tpu.pipeline_mode<synchronous>, transform_indices = @transform_3, window_bounds = array<i64: 16, 1>}, {pipeline_mode = #tpu.pipeline_mode<synchronous>, transform_indices = @transform_4, window_bounds = array<i64: 1, 16>}]} {
    %c0 = arith.constant 0 : index
    %c0_0 = arith.constant 0 : index
    %0 = vector.load %arg1[%c0, %c0_0] : memref<16x32xf32, #tpu.memory_space<vmem>>, vector<16x32xf32>
    %c0_1 = arith.constant 0 : index
    %c0_2 = arith.constant 0 : index
    %1 = vector.load %arg2[%c0_1, %c0_2] : memref<16x32xf32, #tpu.memory_space<vmem>>, vector<16x32xf32>
    %2 = arith.mulf %0, %0 : vector<16x32xf32>
    %cst = arith.constant dense<0.000000e+00> : vector<16xf32>
    %3 = vector.multi_reduction <add>, %2, %cst [1] : vector<16x32xf32> to vector<16xf32>
    %4 = vector.shape_cast %3 : vector<16xf32> to vector<16x1xf32>
    %c0_3 = arith.constant 0 : index
    %c0_4 = arith.constant 0 : index
    %5 = vector.load %arg4[%c0_3, %c0_4] : memref<16x1xf32, #tpu.memory_space<vmem>>, vector<16x1xf32>
    tpu.vector_store %arg4[%c0_3, %c0_4], %4 {strides = array<i32>} : memref<16x1xf32, #tpu.memory_space<vmem>>, vector<16x1xf32>,
    %cst_5 = arith.constant 1.000000e+00 : f32
    %6 = vector.broadcast %cst_5 : f32 to vector<8x32xf32>
    %cst_6 = arith.constant dense<0.000000e+00> : vector<8x16xf32>
    %7 = tpu.matmul %6, %2, %cst_6 {dimension_numbers = #tpu.dot_dimension_numbers<[1], [1], [0], [0], [0, 0, 1, 0], [], []>} : vector<8x32xf32>, vector<16x32xf32>, vector<8x16xf32> -> vector<8x16xf32>
    %8 = vector.extract_strided_slice %7 {offsets = [0, 0], sizes = [1, 16], strides = [1, 1]} : vector<8x16xf32> to vector<1x16xf32>
    %c0_7 = arith.constant 0 : index
    %c0_8 = arith.constant 0 : index
    %9 = vector.load %arg5[%c0_7, %c0_8] : memref<1x16xf32, #tpu.memory_space<vmem>>, vector<1x16xf32>
    tpu.vector_store %arg5[%c0_7, %c0_8], %8 {strides = array<i32>} : memref<1x16xf32, #tpu.memory_space<vmem>>, vector<1x16xf32>,
    %cst_9 = arith.constant dense<0.000000e+00> : vector<32xf32>
    %10 = vector.multi_reduction <add>, %0, %cst_9 [0] : vector<16x32xf32> to vector<32xf32>
    %11 = vector.shape_cast %10 : vector<32xf32> to vector<1x32xf32>
    %cst_10 = arith.constant dense<0.000000e+00> : vector<32xf32>
    %12 = vector.multi_reduction <add>, %1, %cst_10 [0] : vector<16x32xf32> to vector<32xf32>
    %13 = vector.shape_cast %12 : vector<32xf32> to vector<1x32xf32>
    %14 = arith.addf %11, %13 : vector<1x32xf32>
    %cst_11 = arith.constant 3.125000e-02 : f32
    %15 = vector.broadcast %cst_11 : f32 to vector<1x32xf32>
    %16 = arith.mulf %14, %15 : vector<1x32xf32>
    %17 = vector.broadcast %16 : vector<1x32xf32> to vector<16x32xf32>
    %18 = arith.subf %0, %17 : vector<16x32xf32>
    %19 = vector.broadcast %16 : vector<1x32xf32> to vector<16x32xf32>
    %20 = arith.subf %1, %19 : vector<16x32xf32>
    %21 = arith.mulf %18, %18 : vector<16x32xf32>
    %22 = vector.shape_cast %21 : vector<16x32xf32> to vector<1x16x32xf32>
    %cst_12 = arith.constant dense<0.000000e+00> : vector<1xf32>
    %23 = vector.multi_reduction <add>, %22, %cst_12 [1, 2] : vector<1x16x32xf32> to vector<1xf32>
    %24 = vector.shape_cast %23 : vector<1xf32> to vector<1x1x1xf32>
    %25 = vector.extract %24[0, 0, 0] : f32 from vector<1x1x1xf32>
    %26 = arith.mulf %20, %20 : vector<16x32xf32>
    %27 = vector.shape_cast %26 : vector<16x32xf32> to vector<1x16x32xf32>
    %cst_13 = arith.constant dense<0.000000e+00> : vector<1xf32>
    %28 = vector.multi_reduction <add>, %27, %cst_13 [1, 2] : vector<1x16x32xf32> to vector<1xf32>
    %29 = vector.shape_cast %28 : vector<1xf32> to vector<1x1x1xf32>
    %30 = vector.extract %29[0, 0, 0] : f32 from vector<1x1x1xf32>
    %31 = arith.addf %25, %30 : f32
    %cst_14 = arith.constant 6.400000e+01 : f32
    %32 = arith.mulf %cst_14, %31 : f32
    %cst_15 = arith.constant 9.920000e+02 : f32
    %33 = arith.divf %32, %cst_15 : f32
    %cst_16 = arith.constant 4.000000e+00 : f32
    %34 = arith.divf %33, %cst_16 : f32
    %cst_17 = arith.constant 1.600000e+01 : f32
    %35 = arith.mulf %34, %cst_17 : f32
    %cst_18 = arith.constant -1.000000e+00 : f32
    %36 = arith.divf %cst_18, %35 : f32
    %c0_19 = arith.constant 0 : index
    %37 = memref.load %arg3[%c0_19] : memref<1xf32, #tpu.memory_space<smem>>
    memref.store %36, %arg3[%c0_19] : memref<1xf32, #tpu.memory_space<smem>>
    return
  }
  func.func @transform_0(%arg0: i32) -> (i32, i32) {
    %c0_i32 = arith.constant 0 : i32
    %c0_i32_0 = arith.constant 0 : i32
    %c0_i32_1 = arith.constant 0 : i32
    return %c0_i32, %c0_i32_0 : i32, i32
  }
  func.func @transform_1(%arg0: i32) -> (i32, i32) {
    %c0_i32 = arith.constant 0 : i32
    %c0_i32_0 = arith.constant 0 : i32
    %c0_i32_1 = arith.constant 0 : i32
    return %c0_i32, %c0_i32_0 : i32, i32
  }
  func.func @transform_2(%arg0: i32) -> i32 {
    %c0_i32 = arith.constant 0 : i32
    %c0_i32_0 = arith.constant 0 : i32
    return %c0_i32 : i32
  }
  func.func @transform_3(%arg0: i32) -> (i32, i32) {
    %c0_i32 = arith.constant 0 : i32
    %c0_i32_0 = arith.constant 0 : i32
    %c0_i32_1 = arith.constant 0 : i32
    return %c0_i32, %c0_i32_0 : i32, i32
  }
  func.func @transform_4(%arg0: i32) -> (i32, i32) {
    %c0_i32 = arith.constant 0 : i32
    %c0_i32_0 = arith.constant 0 : i32
    %c0_i32_1 = arith.constant 0 : i32
    return %c0_i32, %c0_i32_0 : i32, i32
  }
}

</mosaic_0001>

<llo_original>
// kernel: mmd_loss.2
$region0: #{mmd_loss.2}
  #allocation0 [shape = 'u32[]', space=smem, size = 0x4, offset = 0x4, fixed_abs, tag = 'smem constant byte address 0x4 - core index']
  #allocation1 [shape = 'u32[144,128]{1,0:T(1,128)}', space=vmem, size = 0x12000, scoped, tag = 'internal scratch']
  %s0 = inlined_call_operand.hbm [shape: f32[16,32], index: 0, kind: input, shape index: {}]
  %s1 = inlined_call_operand.hbm [shape: f32[16,32], index: 1, kind: input, shape index: {}]
  %s2 = inlined_call_operand.hbm [shape: f32[1], index: 2, kind: output, shape index: {0}]
  %s3 = inlined_call_operand.vmem [shape: f32[16,1], index: 3, kind: output, shape index: {1}]
  %s4 = inlined_call_operand.vmem [shape: f32[1,16], index: 4, kind: output, shape index: {2}]
  %5 = xla_tuple %s2, %s3, %s4
  %s6 = sld [smem:[#allocation0]]
  $region42: #{mmd_loss.2} parent=0
    _
  %s8 = ssub.s32 1, %s6
  %s9 = scalar_select 0, %s8, %s6
  $region1: #{mmd_loss.2} parent=0
    #allocation2 [shape = 'u8[8192]{0}', space=vmem, size = 0x2000, scoped, tag = 'input window, operand 0, single buffered']
    #allocation3 [shape = 's32[1]{0}', space=sflag, size = 0x4, scoped, tag = 'scoped memory for mmd_loss.2']
    #allocation4 [shape = 's32[1]{0}', space=sflag, size = 0x4, scoped, tag = 'scoped memory for mmd_loss.2']
    #allocation5 [shape = 'u8[8192]{0}', space=vmem, size = 0x2000, scoped, tag = 'input window, operand 1, single buffered']
    #allocation6 [shape = 's32[1]{0}', space=sflag, size = 0x4, scoped, tag = 'scoped memory for mmd_loss.2']
    #allocation7 [shape = 'u8[512]{0}', space=smem, size = 0x200, scoped, tag = 'output window, operand 0, single buffered']
    %10 = vsyncpa [#allocation3], 0
    %11 = vsyncpa [#allocation6], 0
    %12 = vsyncpa [#allocation4], 0
    // Predicated region
    $region2: #{mmd_loss.2} parent=1 // pred_check
      _
    $region3: #{mmd_loss.2} parent=1 // pred_check_branch
      %14 = sbr.rel (0) target = $region5
    $region4: #{mmd_loss.2} parent=1 // pred_region
      %s16 = ssub.s32 256, 256
      %17 = vsyncadd [#allocation3], %s16
      %s18 = sshll.u32 [#allocation2], 4
      %s19 = int_to_ptr.vmem [resolvable:$true] %s18
      %24 = dma.hbm_to_vmem [thread:$0]  %s0, 256, %s19, [#allocation3], 128, 128, 8
    $region5: #{mmd_loss.2} parent=1 // pred_fallthru
      _
    // Predicated region
    $region6: #{mmd_loss.2} parent=1 // pred_check
      _
    $region7: #{mmd_loss.2} parent=1 // pred_check_branch
      %26 = sbr.rel (0) target = $region9
    $region8: #{mmd_loss.2} parent=1 // pred_region
      %s28 = ssub.s32 256, 256
      %29 = vsyncadd [#allocation6], %s28
      %s30 = sshll.u32 [#allocation5], 4
      %s31 = int_to_ptr.vmem [resolvable:$true] %s30
      %36 = dma.hbm_to_vmem [thread:$0]  %s1, 256, %s31, [#allocation6], 128, 128, 8
    $region9: #{mmd_loss.2} parent=1 // pred_fallthru
      _
    // Predicated region
    $region10: #{mmd_loss.2} parent=1 // pred_check
      _
    $region11: #{mmd_loss.2} parent=1 // pred_check_branch
      %38 = sbr.rel (0) target = $region13
    $region12: #{mmd_loss.2} parent=1 // pred_region
      %39 = dma.done [#allocation3], 256
    $region13: #{mmd_loss.2} parent=1 // pred_fallthru
      _
    // Predicated region
    $region14: #{mmd_loss.2} parent=1 // pred_check
      _
    $region15: #{mmd_loss.2} parent=1 // pred_check_branch
      %41 = sbr.rel (0) target = $region17
    $region16: #{mmd_loss.2} parent=1 // pred_region
      %42 = dma.done [#allocation6], 256
    $region17: #{mmd_loss.2} parent=1 // pred_fallthru
      _
    %v43 = vld [vmem:[#allocation2] sm:$0xff]
    %v44 = vld [vmem:[#allocation2 + $0x8] sm:$0xff]
    %v45 = vld [vmem:[#allocation5] sm:$0xff]
    %v46 = vld [vmem:[#allocation5 + $0x8] sm:$0xff]
    %v47 = vmul.f32 %v43, %v43
    %v48 = vmul.f32 %v44, %v44
    %vm49 = vcmask 261120
    %v50 = vsel %vm49, %v47, 0.0
    %51 = vadd.xlane.f32.xlu0 %v50
    %v52 = vpop.xlane.xlu0 %51
    %v53 = vsel %vm49, %v48, 0.0
    %54 = vadd.xlane.f32.xlu0 %v53
    %v55 = vpop.xlane.xlu0 %54
    %vm56 = vcmask 7168
    %57 = vst.msk [vmem:[%s3] sm:$0xff] %vm56, %v52
    %58 = vst.msk [vmem:[%s3 + $0x8] sm:$0xff] %vm56, %v55
    %v60 = vsel %vm49, 1.0, 0
    %v63 = vsel %vm49, %v47, 0
    %v66 = vsel %vm49, %v48, 0
    %68 = vmatprep.subr.mxu0 0.0
    %69 = vmatpush1.xpose.msra.mxu0 %v63
    %70 = vmatprep.subr.mxu0 0.0
    %71 = vmatpush1.xpose.msra.mxu0 %v66
    %72 = vmatprep.subr.mxu0 0.0
    %73 = vmatpush1.xpose.msra.mxu0 0.0
    %74 = vmatprep.subr.mxu0 0.0
    %75 = vmatpush1.xpose.msra.mxu0 0.0
    %76 = vmatprep.subr.mxu0 0.0
    %77 = vmatpush1.xpose.msra.mxu0 0.0
    %78 = vmatprep.subr.mxu0 0.0
    %79 = vmatpush1.xpose.msra.mxu0 0.0
    %80 = vmatprep.subr.mxu0 0.0
    %81 = vmatpush1.xpose.msra.mxu0 0.0
    %82 = vmatprep.subr.mxu0 0.0
    %83 = vmatpush1.xpose.msra.mxu0 0.0
    %84 = vmatprep.subr.mxu0 0.0
    %85 = vmatpush1.xpose.msra.mxu0 0.0
    %86 = vmatprep.subr.mxu0 0.0
    %87 = vmatpush1.xpose.msra.mxu0 0.0
    %88 = vmatprep.subr.mxu0 0.0
    %89 = vmatpush1.xpose.msra.mxu0 0.0
    %90 = vmatprep.subr.mxu0 0.0
    %91 = vmatpush1.xpose.msra.mxu0 0.0
    %92 = vmatprep.subr.mxu0 0.0
    %93 = vmatpush1.xpose.msra.mxu0 0.0
    %94 = vmatprep.subr.mxu0 0.0
    %95 = vmatpush1.xpose.msra.mxu0 0.0
    %96 = vmatprep.subr.mxu0 0.0
    %97 = vmatpush1.xpose.msra.mxu0 0.0
    %98 = vmatprep.subr.mxu0 0.0
    %99 = vmatpush1.xpose.msra.mxu0 0.0
    %100 = vmatprep.subr.mxu0 0.0
    %101 = vmatpush1.xpose.msra.mxu0 0.0
    %102 = vmatprep.subr.mxu0 0.0
    %103 = vmatpush1.xpose.msra.mxu0 0.0
    %104 = vmatprep.subr.mxu0 0.0
    %105 = vmatpush1.xpose.msra.mxu0 0.0
    %106 = vmatprep.subr.mxu0 0.0
    %107 = vmatpush1.xpose.msra.mxu0 0.0
    %108 = vmatprep.subr.mxu0 0.0
    %109 = vmatpush1.xpose.msra.mxu0 0.0
    %110 = vmatprep.subr.mxu0 0.0
    %111 = vmatpush1.xpose.msra.mxu0 0.0
    %112 = vmatprep.subr.mxu0 0.0
    %113 = vmatpush1.xpose.msra.mxu0 0.0
    %114 = vmatprep.subr.mxu0 0.0
    %115 = vmatpush1.xpose.msra.mxu0 0.0
    %116 = vmatprep.subr.mxu0 0.0
    %117 = vmatpush1.xpose.msra.mxu0 0.0
    %118 = vmatprep.subr.mxu0 0.0
    %119 = vmatpush1.xpose.msra.mxu0 0.0
    %120 = vmatprep.subr.mxu0 0.0
    %121 = vmatpush1.xpose.msra.mxu0 0.0
    %122 = vmatprep.subr.mxu0 0.0
    %123 = vmatpush1.xpose.msra.mxu0 0.0
    %124 = vmatprep.subr.mxu0 0.0
    %125 = vmatpush1.xpose.msra.mxu0 0.0
    %126 = vmatprep.subr.mxu0 0.0
    %127 = vmatpush1.xpose.msra.mxu0 0.0
    %128 = vmatprep.subr.mxu0 0.0
    %129 = vmatpush1.xpose.msra.mxu0 0.0
    %130 = vmatprep.subr.mxu0 0.0
    %131 = vmatpush1.xpose.msra.mxu0 0.0
    %132 = vmatprep.mubr.f32.mxu0 0.0
    %133 = vmatmul.mubr.f32.gmra.mrb[0].mxu0 %v60
    %v134 = vpop.f32.mrb[0].mxu0
    %v135 = vadd.f32 0.0, %v134
    %v136 = vpop.f32.mrb[0].mxu0
    %137 = vdwg.mxu0
    %vm138 = vcmask 122880
    %139 = vst.msk [vmem:[%s4] sm:$0x1] %vm138, %v135
    %v140 = vsel %vm49, %v43, 0.0
    %v141 = vsel %vm49, %v44, 0.0
    %v142 = vadd.f32 %v140, %v141
    %v143 = vrot.slane %v142, 4
    %v144 = vadd.f32 %v142, %v143
    %v145 = vrot.slane %v144, 2
    %v146 = vadd.f32 %v144, %v145
    %v147 = vrot.slane %v146, 1
    %v148 = vadd.f32 %v146, %v147
    %v149 = vsel %vm49, %v45, 0.0
    %v150 = vsel %vm49, %v46, 0.0
    %v151 = vadd.f32 %v149, %v150
    %v152 = vrot.slane %v151, 4
    %v153 = vadd.f32 %v151, %v152
    %v154 = vrot.slane %v153, 2
    %v155 = vadd.f32 %v153, %v154
    %v156 = vrot.slane %v155, 1
    %v157 = vadd.f32 %v155, %v156
    %v158 = vadd.f32 %v148, %v157
    %v159 = vmul.f32 %v158, 0.03125
    %v160 = vsub.f32 %v43, %v159
    %v161 = vsub.f32 %v44, %v159
    %v162 = vsub.f32 %v45, %v159
    %v163 = vsub.f32 %v46, %v159
    %v164 = vmul.f32 %v160, %v160
    %v165 = vmul.f32 %v161, %v161
    %v166 = vsel %vm49, %v164, 0.0
    %v167 = vsel %vm49, %v165, 0.0
    %v168 = vadd.f32 %v166, %v167
    %169 = vadd.xlane.f32.xlu0 %v168
    %v170 = vpop.xlane.xlu0 %169
    %v171 = vrot.slane %v170, 4
    %v172 = vadd.f32 %v170, %v171
    %v173 = vrot.slane %v172, 2
    %v174 = vadd.f32 %v172, %v173
    %v175 = vrot.slane %v174, 1
    %v176 = vadd.f32 %v174, %v175
    %s177 = vtos %v176
    %v178 = vmul.f32 %v162, %v162
    %v179 = vmul.f32 %v163, %v163
    %v180 = vsel %vm49, %v178, 0.0
    %v181 = vsel %vm49, %v179, 0.0
    %v182 = vadd.f32 %v180, %v181
    %183 = vadd.xlane.f32.xlu0 %v182
    %v184 = vpop.xlane.xlu0 %183
    %v185 = vrot.slane %v184, 4
    %v186 = vadd.f32 %v184, %v185
    %v187 = vrot.slane %v186, 2
    %v188 = vadd.f32 %v186, %v187
    %v189 = vrot.slane %v188, 1
    %v190 = vadd.f32 %v188, %v189
    %s191 = vtos %v190
    %s192 = sadd.f32 %s177, %s191
    %s193 = smul.f32 %s192, 64.0
    %v194 = vrcp.pop 992.0
    %s195 = vtos %v194
    %s196 = smul.f32 %s193, %s195
    %v197 = vrcp.pop 4.0
    %s198 = vtos %v197
    %s199 = smul.f32 %s196, %s198
    %s200 = smul.f32 %s199, 16.0
    %v201 = vstv %s200
    %v202 = vrcp.pop %v201
    %s203 = vtos %v202
    %s204 = smul.f32 -1.0, %s203
    %s205 = scalar_lea.smem [#allocation7], 0
    %206 = sst [smem:[%s205]] %s204
    // Predicated region
    $region18: #{mmd_loss.2} parent=1 // pred_check
      _
    $region19: #{mmd_loss.2} parent=1 // pred_check_branch
      %208 = sbr.rel (0) target = $region21
    $region20: #{mmd_loss.2} parent=1 // pred_region
      %s210 = ssub.s32 16, 16
      %211 = vsyncadd [#allocation4], %s210
      %214 = dma.smem_to_hbm [#allocation7], 16, %s2, [#allocation4]
    $region21: #{mmd_loss.2} parent=1 // pred_fallthru
      _
    // Predicated region
    $region22: #{mmd_loss.2} parent=1 // pred_check
      _
    $region23: #{mmd_loss.2} parent=1 // pred_check_branch
      %216 = sbr.rel (0) target = $region25
    $region24: #{mmd_loss.2} parent=1 // pred_region
      _
    $region25: #{mmd_loss.2} parent=1 // pred_fallthru
      _
    // Predicated region
    $region26: #{mmd_loss.2} parent=1 // pred_check
      _
    $region27: #{mmd_loss.2} parent=1 // pred_check_branch
      %218 = sbr.rel (0) target = $region29
    $region28: #{mmd_loss.2} parent=1 // pred_region
      _
    $region29: #{mmd_loss.2} parent=1 // pred_fallthru
      _
    // Predicated region
    $region30: #{mmd_loss.2} parent=1 // pred_check
      _
    $region31: #{mmd_loss.2} parent=1 // pred_check_branch
      %220 = sbr.rel (0) target = $region33
    $region32: #{mmd_loss.2} parent=1 // pred_region
      %221 = dma.done [#allocation4], 16
    $region33: #{mmd_loss.2} parent=1 // pred_fallthru
      _
    // Predicated region
    $region34: #{mmd_loss.2} parent=1 // pred_check
      _
    $region35: #{mmd_loss.2} parent=1 // pred_check_branch
      %223 = sbr.rel (0) target = $region37
    $region36: #{mmd_loss.2} parent=1 // pred_region
      _
    $region37: #{mmd_loss.2} parent=1 // pred_fallthru
      _
    // Predicated region
    $region38: #{mmd_loss.2} parent=1 // pred_check
      _
    $region39: #{mmd_loss.2} parent=1 // pred_check_branch
      %225 = sbr.rel (0) target = $region41
    $region40: #{mmd_loss.2} parent=1 // pred_region
      _
    $region41: #{mmd_loss.2} parent=1 // pred_fallthru
      _
    %226 = sfence
    %227 = vsyncpa [#allocation3], 1
    %228 = vsyncpa [#allocation6], 1
    %229 = vsyncpa [#allocation4], 1

// kernel: mmd_loss.3
$region0: #{mmd_loss.3}
  #allocation0 [shape = 'u32[]', space=smem, size = 0x4, offset = 0x4, fixed_abs, tag = 'smem constant byte address 0x4 - core index']
  #allocation1 [shape = 'u32[144,128]{1,0:T(1,128)}', space=vmem, size = 0x12000, scoped, tag = 'internal scratch']
  #allocation2 [shape = 'f32[1]{0:T(128)S(6)}', space=smem, size = 0x200, scoped, tag = 'scoped memory for mmd_loss.3']
  %s0 = inlined_call_operand.<no memory space> [shape: f32[1], index: 0, kind: input, shape index: {}]
  %s1 = inlined_call_operand.vmem [shape: f32[16,32], index: 1, kind: input, shape index: {}]
  %s2 = inlined_call_operand.vmem [shape: f32[16,1], index: 2, kind: input, shape index: {}]
  %s3 = inlined_call_operand.vmem [shape: f32[1,16], index: 3, kind: input, shape index: {}]
  %s4 = inlined_call_operand.vmem [shape: f32[1,8,128], index: 4, kind: output, shape index: {}]
  %s5 = sld [smem:[#allocation0]]
  $region26: #{mmd_loss.3} parent=0
    _
  %s7 = ssub.s32 1, %s5
  %s8 = scalar_select 0, %s7, %s5
  %9 = sst [smem:[#allocation2]] %s0
  // Predicated region
  $region2: #{mmd_loss.3} parent=0 // pred_check
    _
  $region3: #{mmd_loss.3} parent=0 // pred_check_branch
    %11 = sbr.rel (0) target = $region5
  $region4: #{mmd_loss.3} parent=0 // pred_region
    _
  $region5: #{mmd_loss.3} parent=0 // pred_fallthru
    _
  // Predicated region
  $region6: #{mmd_loss.3} parent=0 // pred_check
    _
  $region7: #{mmd_loss.3} parent=0 // pred_check_branch
    %13 = sbr.rel (0) target = $region9
  $region8: #{mmd_loss.3} parent=0 // pred_region
    _
  $region9: #{mmd_loss.3} parent=0 // pred_fallthru
    _
  // Predicated region
  $region10: #{mmd_loss.3} parent=0 // pred_check
    _
  $region11: #{mmd_loss.3} parent=0 // pred_check_branch
    %15 = sbr.rel (0) target = $region13
  $region12: #{mmd_loss.3} parent=0 // pred_region
    _
  $region13: #{mmd_loss.3} parent=0 // pred_fallthru
    _
  // Predicated region
  $region14: #{mmd_loss.3} parent=0 // pred_check
    _
  $region15: #{mmd_loss.3} parent=0 // pred_check_branch
    %17 = sbr.rel (0) target = $region17
  $region16: #{mmd_loss.3} parent=0 // pred_region
    _
  $region17: #{mmd_loss.3} parent=0 // pred_fallthru
    _
  %s18 = smul.u32 0, 16
  %s19 = scalar_lea.vmem %s1, %s18
  %v20 = vld [vmem:[%s19] sm:$0xff]
  %v21 = vld [vmem:[%s19 + $0x8] sm:$0xff]
  %s22 = scalar_lea.vmem %s2, %s18
  %v23 = vld [vmem:[%s22] sm:$0xff]
  %v24 = vld [vmem:[%s22 + $0x8] sm:$0xff]
  %v25 = vld [vmem:[%s1] sm:$0xff]
  %v26 = vld [vmem:[%s1 + $0x8] sm:$0xff]
  %vm27 = vcmask 261120
  %v29 = vsel %vm27, %v20, 0
  %v32 = vsel %vm27, %v21, 0
  %v35 = vsel %vm27, %v25, 0
  %v38 = vsel %vm27, %v26, 0
  %40 = vmatprep.subr.mxu0 0.0
  %41 = vmatpush1.xpose.msra.mxu0 %v35
  %42 = vmatprep.subr.mxu0 0.0
  %43 = vmatpush1.xpose.msra.mxu0 %v38
  %44 = vmatprep.subr.mxu0 0.0
  %45 = vmatpush1.xpose.msra.mxu0 0.0
  %46 = vmatprep.subr.mxu0 0.0
  %47 = vmatpush1.xpose.msra.mxu0 0.0
  %48 = vmatprep.subr.mxu0 0.0
  %49 = vmatpush1.xpose.msra.mxu0 0.0
  %50 = vmatprep.subr.mxu0 0.0
  %51 = vmatpush1.xpose.msra.mxu0 0.0
  %52 = vmatprep.subr.mxu0 0.0
  %53 = vmatpush1.xpose.msra.mxu0 0.0
  %54 = vmatprep.subr.mxu0 0.0
  %55 = vmatpush1.xpose.msra.mxu0 0.0
  %56 = vmatprep.subr.mxu0 0.0
  %57 = vmatpush1.xpose.msra.mxu0 0.0
  %58 = vmatprep.subr.mxu0 0.0
  %59 = vmatpush1.xpose.msra.mxu0 0.0
  %60 = vmatprep.subr.mxu0 0.0
  %61 = vmatpush1.xpose.msra.mxu0 0.0
  %62 = vmatprep.subr.mxu0 0.0
  %63 = vmatpush1.xpose.msra.mxu0 0.0
  %64 = vmatprep.subr.mxu0 0.0
  %65 = vmatpush1.xpose.msra.mxu0 0.0
  %66 = vmatprep.subr.mxu0 0.0
  %67 = vmatpush1.xpose.msra.mxu0 0.0
  %68 = vmatprep.subr.mxu0 0.0
  %69 = vmatpush1.xpose.msra.mxu0 0.0
  %70 = vmatprep.subr.mxu0 0.0
  %71 = vmatpush1.xpose.msra.mxu0 0.0
  %72 = vmatprep.subr.mxu0 0.0
  %73 = vmatpush1.xpose.msra.mxu0 0.0
  %74 = vmatprep.subr.mxu0 0.0
  %75 = vmatpush1.xpose.msra.mxu0 0.0
  %76 = vmatprep.subr.mxu0 0.0
  %77 = vmatpush1.xpose.msra.mxu0 0.0
  %78 = vmatprep.subr.mxu0 0.0
  %79 = vmatpush1.xpose.msra.mxu0 0.0
  %80 = vmatprep.subr.mxu0 0.0
  %81 = vmatpush1.xpose.msra.mxu0 0.0
  %82 = vmatprep.subr.mxu0 0.0
  %83 = vmatpush1.xpose.msra.mxu0 0.0
  %84 = vmatprep.subr.mxu0 0.0
  %85 = vmatpush1.xpose.msra.mxu0 0.0
  %86 = vmatprep.subr.mxu0 0.0
  %87 = vmatpush1.xpose.msra.mxu0 0.0
  %88 = vmatprep.subr.mxu0 0.0
  %89 = vmatpush1.xpose.msra.mxu0 0.0
  %90 = vmatprep.subr.mxu0 0.0
  %91 = vmatpush1.xpose.msra.mxu0 0.0
  %92 = vmatprep.subr.mxu0 0.0
  %93 = vmatpush1.xpose.msra.mxu0 0.0
  %94 = vmatprep.subr.mxu0 0.0
  %95 = vmatpush1.xpose.msra.mxu0 0.0
  %96 = vmatprep.subr.mxu0 0.0
  %97 = vmatpush1.xpose.msra.mxu0 0.0
  %98 = vmatprep.subr.mxu0 0.0
  %99 = vmatpush1.xpose.msra.mxu0 0.0
  %100 = vmatprep.subr.mxu0 0.0
  %101 = vmatpush1.xpose.msra.mxu0 0.0
  %102 = vmatprep.subr.mxu0 0.0
  %103 = vmatpush1.xpose.msra.mxu0 0.0
  %104 = vmatprep.mubr.f32.mxu0 0.0
  %105 = vmatmul.mubr.f32.gmra.mrb[0].mxu0 %v29
  %v106 = vpop.f32.mrb[0].mxu0
  %v107 = vadd.f32 0.0, %v106
  %v108 = vpop.f32.mrb[0].mxu0
  %109 = vmatprep.mubr.f32.mxu0 0.0
  %110 = vmatmul.mubr.f32.gmra.mrb[0].mxu0 %v32
  %v111 = vpop.f32.mrb[0].mxu0
  %v112 = vadd.f32 0.0, %v111
  %v113 = vpop.f32.mrb[0].mxu0
  %114 = vdwg.mxu0
  %v115 = vld [vmem:[%s3] sm:$0x1]
  %117 = vset.pattern.permute.xlu0 0
  %118 = vperm.xlu0 %117, %v23
  %v119 = vpop.permute.xlu0 %118
  %122 = vset.pattern.permute.xlu0 0
  %123 = vperm.xlu0 %122, %v24
  %v124 = vpop.permute.xlu0 %123
  %v127 = vlaneseq
  %v128 = vshrl.u32 %v127, 7
  %v129 = vsub.s32 0, %v128
  %v130 = vrot.slane %v115, %v129
  %v132 = vadd.f32 %v119, %v130
  %v133 = vadd.f32 %v124, %v130
  %v134 = vmul.f32 %v107, 2.0
  %v135 = vmul.f32 %v112, 2.0
  %v136 = vsub.f32 %v132, %v134
  %v137 = vsub.f32 %v133, %v135
  %v138 = vmax.f32 %v136, 0.0
  %v139 = vmax.f32 %v137, 0.0
  %s140 = sld [smem:[#allocation2]]
  %v141 = vstv %s140
  %v142 = vmul.f32 %v138, %v141
  %v143 = vmul.f32 %v139, %v141
  %v144 = vmul.f32 %v142, 1.442695
  %v145 = vpow.pop %v144
  %v146 = vmul.f32 %v143, 1.442695
  %v147 = vpow.pop %v146
  %v148 = vmul.f32 %v145, %v145
  %v149 = vmul.f32 %v147, %v147
  %v150 = vadd.f32 %v145, %v148
  %v151 = vadd.f32 %v147, %v149
  %v152 = vmul.f32 %v148, %v148
  %v153 = vmul.f32 %v149, %v149
  %v154 = vadd.f32 %v150, %v152
  %v155 = vadd.f32 %v151, %v153
  %v156 = vmul.f32 %v152, %v152
  %v157 = vmul.f32 %v153, %v153
  %v158 = vadd.f32 %v154, %v156
  %v159 = vadd.f32 %v155, %v157
  %v160 = vmul.f32 %v156, %v156
  %v161 = vmul.f32 %v157, %v157
  %v162 = vadd.f32 %v158, %v160
  %v163 = vadd.f32 %v159, %v161
  %v164 = vadd.f32 %v162, %v162
  %v165 = vadd.f32 %v163, %v163
  %v166 = vsub.f32 %v164, %v164
  %v167 = vsub.f32 %v165, %v165
  %vm168 = vcmask 130048
  %v169 = vsel %vm168, %v166, 0.0
  %v170 = vsel %vm168, %v167, 0.0
  %v171 = vadd.f32 %v169, %v170
  %172 = vadd.xlane.f32.xlu0 %v171
  %v173 = vpop.xlane.xlu0 %172
  %v174 = vrot.slane %v173, 4
  %v175 = vadd.f32 %v173, %v174
  %v176 = vrot.slane %v175, 2
  %v177 = vadd.f32 %v175, %v176
  %v178 = vrot.slane %v177, 1
  %v179 = vadd.f32 %v177, %v178
  %s180 = vtos %v179
  %v181 = vstv %s180
  %182 = vst [vmem:[%s4] sm:$0xff] %v181
  // Predicated region
  $region18: #{mmd_loss.3} parent=0 // pred_check
    _
  $region19: #{mmd_loss.3} parent=0 // pred_check_branch
    %184 = sbr.rel (0) target = $region21
  $region20: #{mmd_loss.3} parent=0 // pred_region
    _
  $region21: #{mmd_loss.3} parent=0 // pred_fallthru
    _
  // Predicated region
  $region22: #{mmd_loss.3} parent=0 // pred_check
    _
  $region23: #{mmd_loss.3} parent=0 // pred_check_branch
    %186 = sbr.rel (0) target = $region25
  $region24: #{mmd_loss.3} parent=0 // pred_region
    _
  $region25: #{mmd_loss.3} parent=0 // pred_fallthru
    _

</llo_original>
